<compile_context>
chip_gen: v5e
topology: v5e:2x2
jax: 0.10.0
libtpu: 0.0.40
codegen_flags: <defaults>
</compile_context>

<pallas_src>
import functools

import jax
import jax.numpy as jnp
from jax.experimental import pallas as pl
from jax.experimental.pallas import tpu as pltpu

_LANE = 128
_SUBLANE = 8


def _round_up(x, m):
    return (x + m - 1) // m * m


def _cdiv(a, b):
    return -(-a // b)


def _fused_mlp_kernel(x_ref, *refs):
    """refs = (w1, b1, w2, b2, ..., wL, bL, out).

    x:   [TB, In]        (f32)
    w_l: [In_l, Out_l]   (bf16, MXU-native)
    b_l: [1, Out_l]      (f32)
    out: [TB, Out_last]  (f32)
    Hidden activations never leave vregs/VMEM; matmuls feed the MXU bf16 and
    accumulate f32; the bias-add + tanh epilogue stays f32 (v5e-safe).
    """
    o_ref = refs[-1]
    wb_refs = refs[:-1]
    n_layers = len(wb_refs) // 2

    h = x_ref[...].astype(jnp.float32)
    # NOTE: for much deeper / uniform-width MLPs, stack hidden weights into one
    # resident [L, W, W] buffer + lax.fori_loop instead of this unrolled loop.
    for l in range(n_layers):
        w = wb_refs[2 * l][...]                      # bf16 [In_l, Out_l]
        b = wb_refs[2 * l + 1][...]                  # f32  [1, Out_l]
        h = jnp.dot(h.astype(jnp.bfloat16), w,
                    preferred_element_type=jnp.float32) + b
        if l < n_layers - 1:                         # tanh on hidden layers only
            h = jnp.tanh(h)
    o_ref[...] = h.astype(o_ref.dtype)


def init_net_xavier(key, layers):
    """Replicates Net_Xavier.__init__: Xavier-uniform weights, PyTorch default bias.

    Returns PyTorch-layout params: list of (w [out, in], b [out]), f32."""
    params = []
    for in_size, out_size in zip(layers, layers[1:]):
        key, wk, bk = jax.random.split(key, 3)
        a = (6.0 / (in_size + out_size)) ** 0.5      # xavier_uniform_
        w = jax.random.uniform(wk, (out_size, in_size), jnp.float32, -a, a)
        bound = 1.0 / (in_size ** 0.5)               # nn.Linear default bias
        b = jax.random.uniform(bk, (out_size,), jnp.float32, -bound, bound)
        params.append((w, b))
    return params


def prepare_params(params):
    """One-time layout prep: transpose to [In, Out], bf16 weights, pad features.

    The first layer's input dim only needs sublane (8) rounding (it must equal
    x's full last dim); every other feature dim pads to 128 lanes so MXU feeds
    and the final output stay lane-dense.  Biases stay f32."""
    prepared = []
    for l, (w, b) in enumerate(params):
        out_f, in_f = w.shape
        in_pad = _round_up(in_f, _SUBLANE if l == 0 else _LANE)
        out_pad = _round_up(out_f, _LANE)
        wp = (jnp.zeros((in_pad, out_pad), jnp.bfloat16)
              .at[:in_f, :out_f].set(w.T.astype(jnp.bfloat16)))
        bp = jnp.zeros((1, out_pad), jnp.float32).at[:, :out_f].set(b)
        prepared.append((wp, bp))
    out_features = params[-1][0].shape[0]
    return prepared, out_features


def _choose_tb(batch):
    """Batch tile: multiple of 8, <=512; >=2 tiles once batch >= 16 (so the
    'parallel' grid axis can shard over v7x's two TensorCores); picked to
    minimize batch padding."""
    if batch <= _SUBLANE:
        return _SUBLANE
    n_tiles = max(2, _cdiv(batch, 512))
    return min(512, _round_up(_cdiv(batch, n_tiles), _SUBLANE))


@functools.partial(jax.jit, static_argnums=(1,))
def net_xavier_forward(prepared, out_features, x):
    """Fused forward: y = (tanh(...tanh(x W1 + b1)...)) W_L + b_L, one pallas_call."""
    batch, in_features = x.shape
    in_dim = prepared[0][0].shape[0]          # sublane-rounded input width
    out_pad = prepared[-1][0].shape[1]

    tb = _choose_tb(batch)
    batch_pad = _round_up(batch, tb)
    grid = batch_pad // tb

    # Only materialize a padded copy of x when actually needed (no-op for the
    # shipped shapes: batch % tb == 0 and in_features % 8 == 0).
    if batch_pad != batch or in_dim != in_features:
        x_in = (jnp.zeros((batch_pad, in_dim), x.dtype)
                .at[:batch, :in_features].set(x))
    else:
        x_in = x

    nbuf_x = max(1, min(3, grid))             # deeper buffering on the streaming input
    in_specs = [pl.BlockSpec((tb, in_dim), lambda i: (i, 0),
                             pipeline_mode=pl.Buffered(nbuf_x))]
    flat_wb = []
    for wp, bp in prepared:
        # Weights/biases are resident across every batch tile -> 1 buffer each.
        in_specs.append(pl.BlockSpec(wp.shape, lambda i: (0, 0),
                                     pipeline_mode=pl.Buffered(1)))
        in_specs.append(pl.BlockSpec(bp.shape, lambda i: (0, 0),
                                     pipeline_mode=pl.Buffered(1)))
        flat_wb += [wp, bp]

    # Explicit VMEM budget: resident weights/biases + buffered x/out tiles
    # (2x headroom for compiler scratch), clamped to the v7x physical ceiling.
    wb_bytes = sum(a.size * a.dtype.itemsize for a in flat_wb)
    x_tile_bytes = tb * in_dim * x.dtype.itemsize
    out_tile_bytes = tb * out_pad * x.dtype.itemsize
    vmem_limit = int(min(64 << 20,
                         max(8 << 20,
                             2 * (wb_bytes + nbuf_x * x_tile_bytes
                                  + 2 * out_tile_bytes))))

    flops = 2 * batch_pad * sum(wp.shape[0] * wp.shape[1] for wp, _ in prepared)
    transcendentals = batch_pad * sum(wp.shape[1] for wp, _ in prepared[:-1])
    bytes_accessed = (x_in.size * x_in.dtype.itemsize + wb_bytes
                      + batch_pad * out_pad * x.dtype.itemsize)

    out = pl.pallas_call(
        _fused_mlp_kernel,
        out_shape=jax.ShapeDtypeStruct((batch_pad, out_pad), x.dtype),
        grid=(grid,),
        in_specs=in_specs,
        out_specs=pl.BlockSpec((tb, out_pad), lambda i: (i, 0)),
        compiler_params=pltpu.CompilerParams(
            dimension_semantics=("parallel",),   # v7x: batch tiles over 2 TCs
            vmem_limit_bytes=vmem_limit,
        ),
        cost_estimate=pl.CostEstimate(
            flops=flops,
            transcendentals=transcendentals,
            bytes_accessed=bytes_accessed,
        ),
    )(x_in, *flat_wb)

    return out[:batch, :out_features]


if __name__ == "__main__":
    key = jax.random.PRNGKey(0)
    layers = [32, 64, 64, 10]      # Layers argument of Net_Xavier
    batch = 8

    pkey, xkey = jax.random.split(key)
    params = init_net_xavier(pkey, layers)            # PyTorch layout [out, in], f32
    prepared, out_features = prepare_params(params)   # padded [in, out] bf16 + [1, out] f32
    x = jax.random.normal(xkey, (batch, layers[0]), jnp.float32)

    out = net_xavier_forward(prepared, out_features, x)
    out = jax.block_until_ready(out)

    # Reference 1: emulate the kernel numerics (bf16 operands, f32 accumulate).
    ref_bf16 = x
    for l, (w, b) in enumerate(params):
        lhs = ref_bf16.astype(jnp.bfloat16).astype(jnp.float32)
        rhs = w.T.astype(jnp.bfloat16).astype(jnp.float32)
        ref_bf16 = lhs @ rhs + b
        if l < len(params) - 1:
            ref_bf16 = jnp.tanh(ref_bf16)

    # Reference 2: plain f32 forward (original PyTorch module semantics).
    ref_f32 = x
    for l, (w, b) in enumerate(params):
        ref_f32 = ref_f32 @ w.T + b
        if l < len(params) - 1:
            ref_f32 = jnp.tanh(ref_f32)

    assert out.shape == (batch, layers[-1])
    assert jnp.allclose(out, ref_bf16, atol=1e-2, rtol=1e-2), \
        f"max|diff vs bf16 ref| = {float(jnp.max(jnp.abs(out - ref_bf16)))}"
    assert jnp.allclose(out, ref_f32, atol=5e-2, rtol=5e-2), \
        f"max|diff vs f32 ref| = {float(jnp.max(jnp.abs(out - ref_f32)))}"

    print("KERNEL_OK")
</pallas_src>

<mosaic_0001>
module attributes {stable_mosaic.version = 11 : i64} {
  func.func @_fused_mlp_kernel(%arg0: i32, %arg1: memref<8x32xf32, #tpu.memory_space<vmem>>, %arg2: memref<32x128xbf16, #tpu.memory_space<vmem>>, %arg3: memref<1x128xf32, #tpu.memory_space<vmem>>, %arg4: memref<128x128xbf16, #tpu.memory_space<vmem>>, %arg5: memref<1x128xf32, #tpu.memory_space<vmem>>, %arg6: memref<128x128xbf16, #tpu.memory_space<vmem>>, %arg7: memref<1x128xf32, #tpu.memory_space<vmem>>, %arg8: memref<8x128xf32, #tpu.memory_space<vmem>>) attributes {dimension_semantics = [#tpu.dimension_semantics<parallel>], iteration_bounds = array<i64: 1>, scalar_prefetch = 0 : i64, scratch_operands = 0 : i64, tpu.core_type = #tpu.core_type<tc>, window_params = [{pipeline_mode = #tpu.pipeline_mode<synchronous>, transform_indices = @transform_0, window_bounds = array<i64: 8, 32>}, {pipeline_mode = #tpu.pipeline_mode<synchronous>, transform_indices = @transform_1, window_bounds = array<i64: 32, 128>}, {pipeline_mode = #tpu.pipeline_mode<synchronous>, transform_indices = @transform_2, window_bounds = array<i64: 1, 128>}, {pipeline_mode = #tpu.pipeline_mode<synchronous>, transform_indices = @transform_3, window_bounds = array<i64: 128, 128>}, {pipeline_mode = #tpu.pipeline_mode<synchronous>, transform_indices = @transform_4, window_bounds = array<i64: 1, 128>}, {pipeline_mode = #tpu.pipeline_mode<synchronous>, transform_indices = @transform_5, window_bounds = array<i64: 128, 128>}, {pipeline_mode = #tpu.pipeline_mode<synchronous>, transform_indices = @transform_6, window_bounds = array<i64: 1, 128>}, {transform_indices = @transform_7, window_bounds = array<i64: 8, 128>}]} {
    %c0 = arith.constant 0 : index
    %c0_0 = arith.constant 0 : index
    %0 = vector.load %arg1[%c0, %c0_0] : memref<8x32xf32, #tpu.memory_space<vmem>>, vector<8x32xf32>
    %c0_1 = arith.constant 0 : index
    %c0_2 = arith.constant 0 : index
    %1 = vector.load %arg2[%c0_1, %c0_2] : memref<32x128xbf16, #tpu.memory_space<vmem>>, vector<32x128xbf16>
    %c0_3 = arith.constant 0 : index
    %c0_4 = arith.constant 0 : index
    %2 = vector.load %arg3[%c0_3, %c0_4] : memref<1x128xf32, #tpu.memory_space<vmem>>, vector<1x128xf32>
    %3 = arith.truncf %0 : vector<8x32xf32> to vector<8x32xbf16>
    %cst = arith.constant dense<0.000000e+00> : vector<8x128xf32>
    %4 = tpu.matmul %3, %1, %cst {dimension_numbers = #tpu.dot_dimension_numbers<[1], [0], [0], [1], [0, 0, 1, 1], [], []>} : vector<8x32xbf16>, vector<32x128xbf16>, vector<8x128xf32> -> vector<8x128xf32>
    %5 = vector.broadcast %2 : vector<1x128xf32> to vector<8x128xf32>
    %6 = arith.addf %4, %5 : vector<8x128xf32>
    %7 = math.tanh %6 : vector<8x128xf32>
    %c0_5 = arith.constant 0 : index
    %c0_6 = arith.constant 0 : index
    %8 = vector.load %arg4[%c0_5, %c0_6] : memref<128x128xbf16, #tpu.memory_space<vmem>>, vector<128x128xbf16>
    %c0_7 = arith.constant 0 : index
    %c0_8 = arith.constant 0 : index
    %9 = vector.load %arg5[%c0_7, %c0_8] : memref<1x128xf32, #tpu.memory_space<vmem>>, vector<1x128xf32>
    %10 = arith.truncf %7 : vector<8x128xf32> to vector<8x128xbf16>
    %cst_9 = arith.constant dense<0.000000e+00> : vector<8x128xf32>
    %11 = tpu.matmul %10, %8, %cst_9 {dimension_numbers = #tpu.dot_dimension_numbers<[1], [0], [0], [1], [0, 0, 1, 1], [], []>} : vector<8x128xbf16>, vector<128x128xbf16>, vector<8x128xf32> -> vector<8x128xf32>
    %12 = vector.broadcast %9 : vector<1x128xf32> to vector<8x128xf32>
    %13 = arith.addf %11, %12 : vector<8x128xf32>
    %14 = math.tanh %13 : vector<8x128xf32>
    %c0_10 = arith.constant 0 : index
    %c0_11 = arith.constant 0 : index
    %15 = vector.load %arg6[%c0_10, %c0_11] : memref<128x128xbf16, #tpu.memory_space<vmem>>, vector<128x128xbf16>
    %c0_12 = arith.constant 0 : index
    %c0_13 = arith.constant 0 : index
    %16 = vector.load %arg7[%c0_12, %c0_13] : memref<1x128xf32, #tpu.memory_space<vmem>>, vector<1x128xf32>
    %17 = arith.truncf %14 : vector<8x128xf32> to vector<8x128xbf16>
    %cst_14 = arith.constant dense<0.000000e+00> : vector<8x128xf32>
    %18 = tpu.matmul %17, %15, %cst_14 {dimension_numbers = #tpu.dot_dimension_numbers<[1], [0], [0], [1], [0, 0, 1, 1], [], []>} : vector<8x128xbf16>, vector<128x128xbf16>, vector<8x128xf32> -> vector<8x128xf32>
    %19 = vector.broadcast %16 : vector<1x128xf32> to vector<8x128xf32>
    %20 = arith.addf %18, %19 : vector<8x128xf32>
    %c0_15 = arith.constant 0 : index
    %c0_16 = arith.constant 0 : index
    %21 = vector.load %arg8[%c0_15, %c0_16] : memref<8x128xf32, #tpu.memory_space<vmem>>, vector<8x128xf32>
    tpu.vector_store %arg8[%c0_15, %c0_16], %20 {strides = array<i32>} : memref<8x128xf32, #tpu.memory_space<vmem>>, vector<8x128xf32>,
    return
  }
  func.func @transform_0(%arg0: i32) -> (i32, i32) {
    %c0_i32 = arith.constant 0 : i32
    %c0_i32_0 = arith.constant 0 : i32
    return %arg0, %c0_i32 : i32, i32
  }
  func.func @transform_1(%arg0: i32) -> (i32, i32) {
    %c0_i32 = arith.constant 0 : i32
    %c0_i32_0 = arith.constant 0 : i32
    %c0_i32_1 = arith.constant 0 : i32
    return %c0_i32, %c0_i32_0 : i32, i32
  }
  func.func @transform_2(%arg0: i32) -> (i32, i32) {
    %c0_i32 = arith.constant 0 : i32
    %c0_i32_0 = arith.constant 0 : i32
    %c0_i32_1 = arith.constant 0 : i32
    return %c0_i32, %c0_i32_0 : i32, i32
  }
  func.func @transform_3(%arg0: i32) -> (i32, i32) {
    %c0_i32 = arith.constant 0 : i32
    %c0_i32_0 = arith.constant 0 : i32
    %c0_i32_1 = arith.constant 0 : i32
    return %c0_i32, %c0_i32_0 : i32, i32
  }
  func.func @transform_4(%arg0: i32) -> (i32, i32) {
    %c0_i32 = arith.constant 0 : i32
    %c0_i32_0 = arith.constant 0 : i32
    %c0_i32_1 = arith.constant 0 : i32
    return %c0_i32, %c0_i32_0 : i32, i32
  }
  func.func @transform_5(%arg0: i32) -> (i32, i32) {
    %c0_i32 = arith.constant 0 : i32
    %c0_i32_0 = arith.constant 0 : i32
    %c0_i32_1 = arith.constant 0 : i32
    return %c0_i32, %c0_i32_0 : i32, i32
  }
  func.func @transform_6(%arg0: i32) -> (i32, i32) {
    %c0_i32 = arith.constant 0 : i32
    %c0_i32_0 = arith.constant 0 : i32
    %c0_i32_1 = arith.constant 0 : i32
    return %c0_i32, %c0_i32_0 : i32, i32
  }
  func.func @transform_7(%arg0: i32) -> (i32, i32) {
    %c0_i32 = arith.constant 0 : i32
    %c0_i32_0 = arith.constant 0 : i32
    return %arg0, %c0_i32 : i32, i32
  }
}

</mosaic_0001>

<llo_original>
// kernel: net_xavier_forward.1
$region0: #{net_xavier_forward.1}
  #allocation0 [shape = 'u32[]', space=smem, size = 0x4, offset = 0x4, fixed_abs, tag = 'smem constant byte address 0x4 - core index']
  #allocation1 [shape = 'u32[72,128]{1,0:T(1,128)}', space=vmem, size = 0x9000, scoped, tag = 'internal scratch']
  %s0 = inlined_call_operand.hbm [shape: f32[8,32], index: 0, kind: input, shape index: {}]
  %s1 = inlined_call_operand.hbm [shape: bf16[32,128], index: 1, kind: input, shape index: {}]
  %s2 = inlined_call_operand.hbm [shape: f32[1,128], index: 2, kind: input, shape index: {}]
  %s3 = inlined_call_operand.hbm [shape: bf16[128,128], index: 3, kind: input, shape index: {}]
  %s4 = inlined_call_operand.vmem [shape: f32[1,128], index: 4, kind: input, shape index: {}]
  %s5 = inlined_call_operand.hbm [shape: bf16[128,128], index: 5, kind: input, shape index: {}]
  %s6 = inlined_call_operand.vmem [shape: f32[1,128], index: 6, kind: input, shape index: {}]
  %s7 = inlined_call_operand.hbm [shape: f32[8,128], index: 7, kind: output, shape index: {}]
  %s8 = sld [smem:[#allocation0]]
  $region58: #{net_xavier_forward.1} parent=0
    _
  %s10 = ssub.s32 1, %s8
  %s11 = scalar_select 0, %s10, %s8
  $region1: #{net_xavier_forward.1} parent=0
    #allocation2 [shape = 'u8[4096]{0}', space=vmem, size = 0x1000, scoped, tag = 'input window, operand 0, single buffered']
    #allocation3 [shape = 's32[1]{0}', space=sflag, size = 0x4, scoped, tag = 'scoped memory for net_xavier_forward.1']
    #allocation4 [shape = 's32[1]{0}', space=sflag, size = 0x4, scoped, tag = 'scoped memory for net_xavier_forward.1']
    #allocation5 [shape = 'u8[8192]{0}', space=vmem, size = 0x2000, scoped, tag = 'input window, operand 1, single buffered']
    #allocation6 [shape = 's32[1]{0}', space=sflag, size = 0x4, scoped, tag = 'scoped memory for net_xavier_forward.1']
    #allocation7 [shape = 'u8[512]{0}', space=vmem, size = 0x400, scoped, tag = 'input window, operand 2, single buffered']
    #allocation8 [shape = 'u8[32768]{0}', space=vmem, size = 0x8000, scoped, tag = 'input window, operand 3, single buffered']
    #allocation9 [shape = 's32[1]{0}', space=sflag, size = 0x4, scoped, tag = 'scoped memory for net_xavier_forward.1']
    #allocation10 [shape = 'u8[32768]{0}', space=vmem, size = 0x8000, scoped, tag = 'input window, operand 5, single buffered']
    #allocation11 [shape = 'u8[4096]{0}', space=vmem, size = 0x1000, scoped, tag = 'output window, operand 0, single buffered']
    %12 = vsyncpa [#allocation3], 0
    %13 = vsyncpa [#allocation6], 0
    %14 = vsyncpa [#allocation9], 0
    %15 = vsyncpa [#allocation4], 0
    // Predicated region
    $region2: #{net_xavier_forward.1} parent=1 // pred_check
      _
    $region3: #{net_xavier_forward.1} parent=1 // pred_check_branch
      %17 = sbr.rel (0) target = $region5
    $region4: #{net_xavier_forward.1} parent=1 // pred_region
      %19 = vsyncadd [#allocation3], 0
      %s21 = sshll.u32 %s0, 4
      %s22 = int_to_ptr.hbm [resolvable:$true] %s21
      %s23 = sshll.u32 [#allocation2], 4
      %s24 = int_to_ptr.vmem [resolvable:$true] %s23
      %26 = dma.hbm_to_vmem [thread:$0]  %s22, 128, %s24, [#allocation3]
    $region5: #{net_xavier_forward.1} parent=1 // pred_fallthru
      _
    // Predicated region
    $region6: #{net_xavier_forward.1} parent=1 // pred_check
      _
    $region7: #{net_xavier_forward.1} parent=1 // pred_check_branch
      %28 = sbr.rel (0) target = $region9
    $region8: #{net_xavier_forward.1} parent=1 // pred_region
      %30 = vsyncadd [#allocation6], 0
      %s31 = sshll.u32 %s1, 4
      %s32 = int_to_ptr.hbm [resolvable:$true] %s31
      %s33 = sshll.u32 [#allocation5], 4
      %s34 = int_to_ptr.vmem [resolvable:$true] %s33
      %39 = dma.hbm_to_vmem [thread:$0]  %s32, 256, %s34, [#allocation6], 64, 64, 4
    $region9: #{net_xavier_forward.1} parent=1 // pred_fallthru
      _
    // Predicated region
    $region10: #{net_xavier_forward.1} parent=1 // pred_check
      _
    $region11: #{net_xavier_forward.1} parent=1 // pred_check_branch
      %41 = sbr.rel (0) target = $region13
    $region12: #{net_xavier_forward.1} parent=1 // pred_region
      %43 = vsyncadd [#allocation6], 0
      %s45 = sshll.u32 %s2, 4
      %s46 = int_to_ptr.hbm [resolvable:$true] %s45
      %s47 = sshll.u32 [#allocation7], 4
      %s48 = int_to_ptr.vmem [resolvable:$true] %s47
      %50 = dma.hbm_to_vmem [thread:$0]  %s46, 16, %s48, [#allocation6]
    $region13: #{net_xavier_forward.1} parent=1 // pred_fallthru
      _
    // Predicated region
    $region14: #{net_xavier_forward.1} parent=1 // pred_check
      _
    $region15: #{net_xavier_forward.1} parent=1 // pred_check_branch
      %52 = sbr.rel (0) target = $region17
    $region16: #{net_xavier_forward.1} parent=1 // pred_region
      %54 = vsyncadd [#allocation9], 0
      %s55 = sshll.u32 %s3, 4
      %s56 = int_to_ptr.hbm [resolvable:$true] %s55
      %s57 = sshll.u32 [#allocation8], 4
      %s58 = int_to_ptr.vmem [resolvable:$true] %s57
      %63 = dma.hbm_to_vmem [thread:$0]  %s56, 1024, %s58, [#allocation9], 64, 64, 4
    $region17: #{net_xavier_forward.1} parent=1 // pred_fallthru
      _
    // Predicated region
    $region18: #{net_xavier_forward.1} parent=1 // pred_check
      _
    $region19: #{net_xavier_forward.1} parent=1 // pred_check_branch
      %65 = sbr.rel (0) target = $region21
    $region20: #{net_xavier_forward.1} parent=1 // pred_region
      _
    $region21: #{net_xavier_forward.1} parent=1 // pred_fallthru
      _
    // Predicated region
    $region22: #{net_xavier_forward.1} parent=1 // pred_check
      _
    $region23: #{net_xavier_forward.1} parent=1 // pred_check_branch
      %67 = sbr.rel (0) target = $region25
    $region24: #{net_xavier_forward.1} parent=1 // pred_region
      %69 = vsyncadd [#allocation9], 0
      %s70 = sshll.u32 %s5, 4
      %s71 = int_to_ptr.hbm [resolvable:$true] %s70
      %s72 = sshll.u32 [#allocation10], 4
      %s73 = int_to_ptr.vmem [resolvable:$true] %s72
      %78 = dma.hbm_to_vmem [thread:$0]  %s71, 1024, %s73, [#allocation9], 64, 64, 4
    $region25: #{net_xavier_forward.1} parent=1 // pred_fallthru
      _
    // Predicated region
    $region26: #{net_xavier_forward.1} parent=1 // pred_check
      _
    $region27: #{net_xavier_forward.1} parent=1 // pred_check_branch
      %80 = sbr.rel (0) target = $region29
    $region28: #{net_xavier_forward.1} parent=1 // pred_region
      _
    $region29: #{net_xavier_forward.1} parent=1 // pred_fallthru
      _
    // Predicated region
    $region30: #{net_xavier_forward.1} parent=1 // pred_check
      _
    $region31: #{net_xavier_forward.1} parent=1 // pred_check_branch
      %82 = sbr.rel (0) target = $region33
    $region32: #{net_xavier_forward.1} parent=1 // pred_region
      %84 = dma.done [#allocation3], 128
    $region33: #{net_xavier_forward.1} parent=1 // pred_fallthru
      _
    // Predicated region
    $region34: #{net_xavier_forward.1} parent=1 // pred_check
      _
    $region35: #{net_xavier_forward.1} parent=1 // pred_check_branch
      %86 = sbr.rel (0) target = $region37
    $region36: #{net_xavier_forward.1} parent=1 // pred_region
      %88 = dma.done [#allocation6], 256
    $region37: #{net_xavier_forward.1} parent=1 // pred_fallthru
      _
    // Predicated region
    $region38: #{net_xavier_forward.1} parent=1 // pred_check
      _
    $region39: #{net_xavier_forward.1} parent=1 // pred_check_branch
      %90 = sbr.rel (0) target = $region41
    $region40: #{net_xavier_forward.1} parent=1 // pred_region
      %92 = dma.done [#allocation6], 16
    $region41: #{net_xavier_forward.1} parent=1 // pred_fallthru
      _
    // Predicated region
    $region42: #{net_xavier_forward.1} parent=1 // pred_check
      _
    $region43: #{net_xavier_forward.1} parent=1 // pred_check_branch
      %94 = sbr.rel (0) target = $region45
    $region44: #{net_xavier_forward.1} parent=1 // pred_region
      %96 = dma.done [#allocation9], 1024
    $region45: #{net_xavier_forward.1} parent=1 // pred_fallthru
      _
    // Predicated region
    $region46: #{net_xavier_forward.1} parent=1 // pred_check
      _
    $region47: #{net_xavier_forward.1} parent=1 // pred_check_branch
      %98 = sbr.rel (0) target = $region49
    $region48: #{net_xavier_forward.1} parent=1 // pred_region
      %100 = dma.done [#allocation9], 1024
    $region49: #{net_xavier_forward.1} parent=1 // pred_fallthru
      _
    %v102 = vld [vmem:[#allocation2] sm:$0xff]
    %v103 = vld [vmem:[#allocation5] sm:$0xf]
    %v104 = vld [vmem:[#allocation5 + $0x4] sm:$0xf]
    %v105 = vld [vmem:[#allocation5 + $0x8] sm:$0xf]
    %v106 = vld [vmem:[#allocation5 + $0xc] sm:$0xf]
    %v107 = vld [vmem:[#allocation7] sm:$0x1]
    %v108 = vpack.c.bf16 %v102, %v102
    %v110 = vperm.slane %v107, 0
    %v116 = vunpack.c.l.b16 %v103
    %v117 = vunpack.c.l.b16 %v104
    %v118 = vunpack.c.l.b16 %v105
    %v119 = vunpack.c.l.b16 %v106
    %v120 = vpack.c.b16 %v117, %v116
    %v121 = vpack.c.b16 %v119, %v118
    %vm124 = vcmask 261120
    %v126 = vsel %vm124, %v108, 0
    %128 = vmatpush.bf16.msra.mxu0 0
    %129 = vmatpush.bf16.msra.mxu0 0
    %130 = vmatpush.bf16.msra.mxu0 0
    %131 = vmatpush.bf16.msra.mxu0 0
    %132 = vmatpush.bf16.msra.mxu0 0
    %133 = vmatpush.bf16.msra.mxu0 0
    %134 = vmatpush.bf16.msra.mxu0 %v121
    %135 = vmatpush.bf16.msra.mxu0 %v120
    %136 = vmatmul.bf16.gmra.mxu0 %v126
    %v137 = vpop.f32.mrf.mxu0
    %v138 = vadd.f32 %v110, %v137
    %v139 = vpop.f32.mrf.mxu0
    %140 = vdwg.mxu0
    %v141 = vtanh.pop %v138
    %v142 = vld [vmem:[#allocation8] sm:$0xf]
    %v143 = vld [vmem:[#allocation8 + $0x4] sm:$0xf]
    %v144 = vld [vmem:[#allocation8 + $0x8] sm:$0xf]
    %v145 = vld [vmem:[#allocation8 + $0xc] sm:$0xf]
    %v146 = vld [vmem:[#allocation8 + $0x10] sm:$0xf]
    %v147 = vld [vmem:[#allocation8 + $0x14] sm:$0xf]
    %v148 = vld [vmem:[#allocation8 + $0x18] sm:$0xf]
    %v149 = vld [vmem:[#allocation8 + $0x1c] sm:$0xf]
    %v150 = vld [vmem:[#allocation8 + $0x20] sm:$0xf]
    %v151 = vld [vmem:[#allocation8 + $0x24] sm:$0xf]
    %v152 = vld [vmem:[#allocation8 + $0x28] sm:$0xf]
    %v153 = vld [vmem:[#allocation8 + $0x2c] sm:$0xf]
    %v154 = vld [vmem:[#allocation8 + $0x30] sm:$0xf]
    %v155 = vld [vmem:[#allocation8 + $0x34] sm:$0xf]
    %v156 = vld [vmem:[#allocation8 + $0x38] sm:$0xf]
    %v157 = vld [vmem:[#allocation8 + $0x3c] sm:$0xf]
    %v158 = vld [vmem:[%s4] sm:$0x1]
    %v159 = vpack.c.bf16 %v141, %v141
    %v161 = vperm.slane %v158, 0
    %v179 = vunpack.c.l.b16 %v142
    %v180 = vunpack.c.l.b16 %v143
    %v181 = vunpack.c.l.b16 %v144
    %v182 = vunpack.c.l.b16 %v145
    %v183 = vunpack.c.l.b16 %v146
    %v184 = vunpack.c.l.b16 %v147
    %v185 = vunpack.c.l.b16 %v148
    %v186 = vunpack.c.l.b16 %v149
    %v187 = vunpack.c.l.b16 %v150
    %v188 = vunpack.c.l.b16 %v151
    %v189 = vunpack.c.l.b16 %v152
    %v190 = vunpack.c.l.b16 %v153
    %v191 = vunpack.c.l.b16 %v154
    %v192 = vunpack.c.l.b16 %v155
    %v193 = vunpack.c.l.b16 %v156
    %v194 = vunpack.c.l.b16 %v157
    %v195 = vpack.c.b16 %v180, %v179
    %v196 = vpack.c.b16 %v182, %v181
    %v197 = vpack.c.b16 %v184, %v183
    %v198 = vpack.c.b16 %v186, %v185
    %v199 = vpack.c.b16 %v188, %v187
    %v200 = vpack.c.b16 %v190, %v189
    %v201 = vpack.c.b16 %v192, %v191
    %v202 = vpack.c.b16 %v194, %v193
    %211 = vmatpush.bf16.msra.mxu0 %v202
    %212 = vmatpush.bf16.msra.mxu0 %v201
    %213 = vmatpush.bf16.msra.mxu0 %v200
    %214 = vmatpush.bf16.msra.mxu0 %v199
    %215 = vmatpush.bf16.msra.mxu0 %v198
    %216 = vmatpush.bf16.msra.mxu0 %v197
    %217 = vmatpush.bf16.msra.mxu0 %v196
    %218 = vmatpush.bf16.msra.mxu0 %v195
    %219 = vmatmul.bf16.gmra.mxu0 %v159
    %v220 = vpop.f32.mrf.mxu0
    %v221 = vadd.f32 %v161, %v220
    %v222 = vpop.f32.mrf.mxu0
    %223 = vdwg.mxu0
    %v224 = vtanh.pop %v221
    %v225 = vld [vmem:[#allocation10] sm:$0xf]
    %v226 = vld [vmem:[#allocation10 + $0x4] sm:$0xf]
    %v227 = vld [vmem:[#allocation10 + $0x8] sm:$0xf]
    %v228 = vld [vmem:[#allocation10 + $0xc] sm:$0xf]
    %v229 = vld [vmem:[#allocation10 + $0x10] sm:$0xf]
    %v230 = vld [vmem:[#allocation10 + $0x14] sm:$0xf]
    %v231 = vld [vmem:[#allocation10 + $0x18] sm:$0xf]
    %v232 = vld [vmem:[#allocation10 + $0x1c] sm:$0xf]
    %v233 = vld [vmem:[#allocation10 + $0x20] sm:$0xf]
    %v234 = vld [vmem:[#allocation10 + $0x24] sm:$0xf]
    %v235 = vld [vmem:[#allocation10 + $0x28] sm:$0xf]
    %v236 = vld [vmem:[#allocation10 + $0x2c] sm:$0xf]
    %v237 = vld [vmem:[#allocation10 + $0x30] sm:$0xf]
    %v238 = vld [vmem:[#allocation10 + $0x34] sm:$0xf]
    %v239 = vld [vmem:[#allocation10 + $0x38] sm:$0xf]
    %v240 = vld [vmem:[#allocation10 + $0x3c] sm:$0xf]
    %v241 = vld [vmem:[%s6] sm:$0x1]
    %v242 = vpack.c.bf16 %v224, %v224
    %v244 = vperm.slane %v241, 0
    %v262 = vunpack.c.l.b16 %v225
    %v263 = vunpack.c.l.b16 %v226
    %v264 = vunpack.c.l.b16 %v227
    %v265 = vunpack.c.l.b16 %v228
    %v266 = vunpack.c.l.b16 %v229
    %v267 = vunpack.c.l.b16 %v230
    %v268 = vunpack.c.l.b16 %v231
    %v269 = vunpack.c.l.b16 %v232
    %v270 = vunpack.c.l.b16 %v233
    %v271 = vunpack.c.l.b16 %v234
    %v272 = vunpack.c.l.b16 %v235
    %v273 = vunpack.c.l.b16 %v236
    %v274 = vunpack.c.l.b16 %v237
    %v275 = vunpack.c.l.b16 %v238
    %v276 = vunpack.c.l.b16 %v239
    %v277 = vunpack.c.l.b16 %v240
    %v278 = vpack.c.b16 %v263, %v262
    %v279 = vpack.c.b16 %v265, %v264
    %v280 = vpack.c.b16 %v267, %v266
    %v281 = vpack.c.b16 %v269, %v268
    %v282 = vpack.c.b16 %v271, %v270
    %v283 = vpack.c.b16 %v273, %v272
    %v284 = vpack.c.b16 %v275, %v274
    %v285 = vpack.c.b16 %v277, %v276
    %294 = vmatpush.bf16.msra.mxu0 %v285
    %295 = vmatpush.bf16.msra.mxu0 %v284
    %296 = vmatpush.bf16.msra.mxu0 %v283
    %297 = vmatpush.bf16.msra.mxu0 %v282
    %298 = vmatpush.bf16.msra.mxu0 %v281
    %299 = vmatpush.bf16.msra.mxu0 %v280
    %300 = vmatpush.bf16.msra.mxu0 %v279
    %301 = vmatpush.bf16.msra.mxu0 %v278
    %302 = vmatmul.bf16.gmra.mxu0 %v242
    %v303 = vpop.f32.mrf.mxu0
    %v304 = vadd.f32 %v244, %v303
    %v305 = vpop.f32.mrf.mxu0
    %306 = vdwg.mxu0
    %307 = vst [vmem:[#allocation11] sm:$0xff] %v304
    // Predicated region
    $region50: #{net_xavier_forward.1} parent=1 // pred_check
      _
    $region51: #{net_xavier_forward.1} parent=1 // pred_check_branch
      %309 = sbr.rel (0) target = $region53
    $region52: #{net_xavier_forward.1} parent=1 // pred_region
      %311 = vsyncadd [#allocation4], 0
      %s313 = sshll.u32 [#allocation11], 4
      %s314 = int_to_ptr.vmem [resolvable:$true] %s313
      %s315 = sshll.u32 %s7, 4
      %s316 = int_to_ptr.hbm [resolvable:$true] %s315
      %318 = dma.vmem_to_hbm [thread:$0]  %s314, 128, %s316, [#allocation4]
    $region53: #{net_xavier_forward.1} parent=1 // pred_fallthru
      _
    // Predicated region
    $region54: #{net_xavier_forward.1} parent=1 // pred_check
      _
    $region55: #{net_xavier_forward.1} parent=1 // pred_check_branch
      %320 = sbr.rel (0) target = $region57
    $region56: #{net_xavier_forward.1} parent=1 // pred_region
      %322 = dma.done [#allocation4], 128
    $region57: #{net_xavier_forward.1} parent=1 // pred_fallthru
      _
    %323 = vsyncpa [#allocation3], 1
    %324 = vsyncpa [#allocation6], 1
    %325 = vsyncpa [#allocation9], 1
    %326 = vsyncpa [#allocation4], 1

</llo_original>
